<compile_context>
chip_gen: v5e
topology: v5e:2x2
jax: 0.10.0
libtpu: 0.0.40
codegen_flags: <defaults>
</compile_context>

<pallas_src>
import functools

import numpy as np
import jax
import jax.numpy as jnp
from jax import lax
from jax.experimental import pallas as pl
from jax.experimental.pallas import tpu as pltpu

# Spatial size fixed by the module: result.view(-1, dims[0], 8, 8)
_H = 8
_W = 8
_HW = _H * _W


def pack_neck_decoder_params(fc_w, fc_b, conv_w, conv_b, dims):
    """One-time parameter folding (float64 numpy, outside the jitted path).

    Returns:
      w_total : (L, N)    fc + 3x3/pad1 conv folded, columns in PixelShuffle order
      b_total : (1, N)    matching bias
      g_avg   : (N, Cout) per-InstanceNorm-group column averaging (1/HW entries)
      g_t     : (Cout, N) broadcast-back (group membership) matrix
    with N = c1 * 16 * 16 = Cout * 64.
    """
    c0, c1 = dims
    cout = 4 * c1
    n = cout * _HW

    fw = np.asarray(fc_w, np.float64)    # (L, c0*HW), col = c*64 + y*8 + x
    fb = np.asarray(fc_b, np.float64)    # (c0*HW,)
    cw = np.asarray(conv_w, np.float64)  # (cout, c0, 3, 3), OIHW
    cb = np.asarray(conv_b, np.float64)  # (cout,)

    # Conv2d(3x3, pad=1) as an explicit matrix (c0*HW) -> (cout*HW), both flat
    # in (channel, y, x) order.  Zero padding handled by simply skipping
    # out-of-range taps (no wrap-around / mask subtleties).
    M = np.zeros((c0 * _HW, cout * _HW), np.float64)
    ci = np.arange(c0)[:, None]          # (c0, 1)
    oi = np.arange(cout)[None, :]        # (1, cout)
    for ky in range(3):
        for kx in range(3):
            w_oc = cw[:, :, ky, kx].T    # (c0, cout)
            for yo in range(_H):
                yi = yo + ky - 1
                if not (0 <= yi < _H):
                    continue
                for xo in range(_W):
                    xi = xo + kx - 1
                    if not (0 <= xi < _W):
                        continue
                    M[ci * _HW + (yi * _W + xi),
                      oi * _HW + (yo * _W + xo)] += w_oc

    w_conv = fw @ M                                   # (L, cout*HW), conv order
    b_conv = fb @ M + np.repeat(cb, _HW)              # (cout*HW,)

    # Permute columns: conv order (o, y, x) -> PixelShuffle order
    # (c1, 2y+sy, 2x+sx) with o = c1i*4 + sy*2 + sx, so the kernel output
    # reshapes straight to (B, c1, 16, 16) with no transpose.
    perm = np.zeros(n, np.int64)
    group = np.zeros(n, np.int64)        # group[col] = conv channel o (IN group)
    for c in range(c1):
        for sy in range(2):
            for sx in range(2):
                o = c * 4 + sy * 2 + sx
                for y in range(_H):
                    for x in range(_W):
                        col = c * (4 * _HW) + (2 * y + sy) * (2 * _W) + (2 * x + sx)
                        perm[col] = o * _HW + y * _W + x
                        group[col] = o

    w_total = w_conv[:, perm]                          # (L, N)
    b_total = b_conv[perm][None, :]                    # (1, N)

    g = np.zeros((n, cout), np.float64)
    g[np.arange(n), group] = 1.0
    g_avg = g / _HW                                    # (N, Cout)
    g_t = g.T                                          # (Cout, N)

    f32 = lambda a: jnp.asarray(a, jnp.float32)
    return f32(w_total), f32(b_total), f32(g_avg), f32(g_t)


def _neck_kernel(z_ref, w_ref, b_ref, gavg_ref, gt_ref, o_ref):
    # z_ref  : (B, L)        w_ref : (L, N)        b_ref : (1, N)
    # gavg_ref: (N, Cout)    gt_ref: (Cout, N)     o_ref : (B, N)
    # fc + conv + PixelShuffle ordering, pre-folded: one MXU matmul + bias.
    y = jnp.dot(z_ref[...], w_ref[...],
                preferred_element_type=jnp.float32) + b_ref[...]        # (B, N)

    gavg = gavg_ref[...]
    gt = gt_ref[...]

    # InstanceNorm2d (affine=False, eps=1e-5) per (batch, conv-channel) group,
    # done entirely with full-lane vector ops + tiny MXU matmuls (no loops,
    # no masked partial stores).
    mean = jnp.dot(y, gavg, preferred_element_type=jnp.float32)         # (B, Cout)
    cen = y - jnp.dot(mean, gt, preferred_element_type=jnp.float32)     # (B, N)
    var = jnp.dot(cen * cen, gavg, preferred_element_type=jnp.float32)  # (B, Cout)
    rstd_b = jnp.dot(lax.rsqrt(var + 1e-5), gt,
                     preferred_element_type=jnp.float32)                # (B, N)
    yn = cen * rstd_b

    # LeakyReLU(0.01) + single lane-dense store of the whole output slab.
    o_ref[...] = jnp.where(yn >= 0, yn, 0.01 * yn)


def neck_decoder_forward(z, w_total, b_total, g_avg, g_t, *, dims):
    """z: (B, latent_dim) -> (B, dims[1], 16, 16)  (matches PyTorch NeckDecoder)."""
    B = z.shape[0]
    c1 = dims[1]
    n = w_total.shape[1]

    out = pl.pallas_call(
        _neck_kernel,
        out_shape=jax.ShapeDtypeStruct((B, n), jnp.float32),
        in_specs=[pl.BlockSpec(memory_space=pltpu.MemorySpace.VMEM)] * 5,
        out_specs=pl.BlockSpec(memory_space=pltpu.MemorySpace.VMEM),
    )(z, w_total, b_total, g_avg, g_t)

    # Columns are already in PixelShuffle order -> pure contiguous reshape.
    return out.reshape(B, c1, 2 * _H, 2 * _W)


# ---------------- pure-JAX reference (for correctness check) ----------------

def _reference(z, fc_w, fc_b, conv_w, conv_b, dims):
    B = z.shape[0]
    c0, c1 = dims
    hp = lax.Precision.HIGHEST
    h = jnp.dot(z, fc_w, precision=hp) + fc_b
    x = h.reshape(B, c0, _H, _W)
    y = lax.conv_general_dilated(
        x, conv_w, (1, 1), [(1, 1), (1, 1)],
        dimension_numbers=("NCHW", "OIHW", "NCHW"), precision=hp)
    y = y + conv_b.reshape(1, -1, 1, 1)
    mean = y.mean(axis=(2, 3), keepdims=True)
    var = ((y - mean) ** 2).mean(axis=(2, 3), keepdims=True)
    y = (y - mean) / jnp.sqrt(var + 1e-5)
    y = jnp.where(y >= 0, y, 0.01 * y)
    y = y.reshape(B, c1, 2, 2, _H, _W).transpose(0, 1, 4, 2, 5, 3)
    return y.reshape(B, c1, 2 * _H, 2 * _W)


if __name__ == "__main__":
    key = jax.random.PRNGKey(0)
    B, latent_dim = 2, 32
    dims = (8, 4)            # dims[0]=8 conv-in channels, dims[1]=4 output channels
    c0, c1 = dims
    cout = 4 * c1

    k = jax.random.split(key, 5)
    z = jax.random.normal(k[0], (B, latent_dim), jnp.float32)
    fc_w = jax.random.normal(k[1], (latent_dim, c0 * _HW), jnp.float32) * 0.1
    fc_b = jax.random.normal(k[2], (c0 * _HW,), jnp.float32) * 0.1
    conv_w = jax.random.normal(k[3], (cout, c0, 3, 3), jnp.float32) * 0.1
    conv_b = jax.random.normal(k[4], (cout,), jnp.float32) * 0.1

    # One-time parameter folding, hoisted out of the per-call jitted path.
    packed = pack_neck_decoder_params(fc_w, fc_b, conv_w, conv_b, dims)

    fwd = jax.jit(functools.partial(neck_decoder_forward, dims=dims))
    out = fwd(z, *packed)
    out = jax.block_until_ready(out)
    assert out.shape == (B, c1, 16, 16), out.shape

    ref = _reference(z, fc_w, fc_b, conv_w, conv_b, dims)
    err = float(jnp.max(jnp.abs(out - ref)))
    assert err < 2e-4, f"max abs err {err}"

    print("KERNEL_OK")
</pallas_src>

<mosaic_0001>
module attributes {stable_mosaic.version = 11 : i64} {
  func.func @_neck_kernel(%arg0: memref<2x32xf32, #tpu.memory_space<vmem>>, %arg1: memref<32x1024xf32, #tpu.memory_space<vmem>>, %arg2: memref<1x1024xf32, #tpu.memory_space<vmem>>, %arg3: memref<1024x16xf32, #tpu.memory_space<vmem>>, %arg4: memref<16x1024xf32, #tpu.memory_space<vmem>>, %arg5: memref<2x1024xf32, #tpu.memory_space<vmem>>) attributes {dimension_semantics = [], scalar_prefetch = 0 : i64, scratch_operands = 0 : i64, tpu.core_type = #tpu.core_type<tc>} {
    %c0 = arith.constant 0 : index
    %c0_0 = arith.constant 0 : index
    %0 = vector.load %arg0[%c0, %c0_0] : memref<2x32xf32, #tpu.memory_space<vmem>>, vector<2x32xf32>
    %c0_1 = arith.constant 0 : index
    %c0_2 = arith.constant 0 : index
    %1 = vector.load %arg1[%c0_1, %c0_2] : memref<32x1024xf32, #tpu.memory_space<vmem>>, vector<32x1024xf32>
    %cst = arith.constant dense<0.000000e+00> : vector<2x1024xf32>
    %2 = tpu.matmul %0, %1, %cst {dimension_numbers = #tpu.dot_dimension_numbers<[1], [0], [0], [1], [0, 0, 1, 1], [], []>} : vector<2x32xf32>, vector<32x1024xf32>, vector<2x1024xf32> -> vector<2x1024xf32>
    %c0_3 = arith.constant 0 : index
    %c0_4 = arith.constant 0 : index
    %3 = vector.load %arg2[%c0_3, %c0_4] : memref<1x1024xf32, #tpu.memory_space<vmem>>, vector<1x1024xf32>
    %4 = vector.broadcast %3 : vector<1x1024xf32> to vector<2x1024xf32>
    %5 = arith.addf %2, %4 : vector<2x1024xf32>
    %c0_5 = arith.constant 0 : index
    %c0_6 = arith.constant 0 : index
    %6 = vector.load %arg3[%c0_5, %c0_6] : memref<1024x16xf32, #tpu.memory_space<vmem>>, vector<1024x16xf32>
    %c0_7 = arith.constant 0 : index
    %c0_8 = arith.constant 0 : index
    %7 = vector.load %arg4[%c0_7, %c0_8] : memref<16x1024xf32, #tpu.memory_space<vmem>>, vector<16x1024xf32>
    %cst_9 = arith.constant dense<0.000000e+00> : vector<2x16xf32>
    %8 = tpu.matmul %5, %6, %cst_9 {dimension_numbers = #tpu.dot_dimension_numbers<[1], [0], [0], [1], [0, 0, 1, 1], [], []>} : vector<2x1024xf32>, vector<1024x16xf32>, vector<2x16xf32> -> vector<2x16xf32>
    %cst_10 = arith.constant dense<0.000000e+00> : vector<2x1024xf32>
    %9 = tpu.matmul %8, %7, %cst_10 {dimension_numbers = #tpu.dot_dimension_numbers<[1], [0], [0], [1], [0, 0, 1, 1], [], []>} : vector<2x16xf32>, vector<16x1024xf32>, vector<2x1024xf32> -> vector<2x1024xf32>
    %10 = arith.subf %5, %9 : vector<2x1024xf32>
    %11 = arith.mulf %10, %10 : vector<2x1024xf32>
    %cst_11 = arith.constant dense<0.000000e+00> : vector<2x16xf32>
    %12 = tpu.matmul %11, %6, %cst_11 {dimension_numbers = #tpu.dot_dimension_numbers<[1], [0], [0], [1], [0, 0, 1, 1], [], []>} : vector<2x1024xf32>, vector<1024x16xf32>, vector<2x16xf32> -> vector<2x16xf32>
    %cst_12 = arith.constant 9.99999974E-6 : f32
    %13 = vector.broadcast %cst_12 : f32 to vector<2x16xf32>
    %14 = arith.addf %12, %13 : vector<2x16xf32>
    %15 = math.rsqrt %14 : vector<2x16xf32>
    %cst_13 = arith.constant dense<0.000000e+00> : vector<2x1024xf32>
    %16 = tpu.matmul %15, %7, %cst_13 {dimension_numbers = #tpu.dot_dimension_numbers<[1], [0], [0], [1], [0, 0, 1, 1], [], []>} : vector<2x16xf32>, vector<16x1024xf32>, vector<2x1024xf32> -> vector<2x1024xf32>
    %17 = arith.mulf %10, %16 : vector<2x1024xf32>
    %cst_14 = arith.constant 0.000000e+00 : f32
    %18 = vector.broadcast %cst_14 : f32 to vector<2x1024xf32>
    %19 = arith.cmpf oge, %17, %18 : vector<2x1024xf32>
    %cst_15 = arith.constant 0.00999999977 : f32
    %20 = vector.broadcast %cst_15 : f32 to vector<2x1024xf32>
    %21 = arith.mulf %20, %17 : vector<2x1024xf32>
    %22 = arith.select %19, %17, %21 : vector<2x1024xi1>, vector<2x1024xf32>
    %c0_16 = arith.constant 0 : index
    %c0_17 = arith.constant 0 : index
    %23 = vector.load %arg5[%c0_16, %c0_17] : memref<2x1024xf32, #tpu.memory_space<vmem>>, vector<2x1024xf32>
    tpu.vector_store %arg5[%c0_16, %c0_17], %22 {strides = array<i32>} : memref<2x1024xf32, #tpu.memory_space<vmem>>, vector<2x1024xf32>,
    return
  }
}

</mosaic_0001>

<llo_original>
// kernel: neck_decoder_forward.1
$region0: #{neck_decoder_forward.1}
  #allocation0 [shape = 'u32[]', space=smem, size = 0x4, offset = 0x4, fixed_abs, tag = 'smem constant byte address 0x4 - core index']
  #allocation1 [shape = 'u32[72,128]{1,0:T(1,128)}', space=vmem, size = 0x9000, scoped, tag = 'internal scratch']
  %s0 = inlined_call_operand.vmem [shape: f32[2,32], index: 0, kind: input, shape index: {}]
  %s1 = inlined_call_operand.vmem [shape: f32[32,1024], index: 1, kind: input, shape index: {}]
  %s2 = inlined_call_operand.vmem [shape: f32[1,1024], index: 2, kind: input, shape index: {}]
  %s3 = inlined_call_operand.vmem [shape: f32[1024,16], index: 3, kind: input, shape index: {}]
  %s4 = inlined_call_operand.vmem [shape: f32[16,1024], index: 4, kind: input, shape index: {}]
  %s5 = inlined_call_operand.vmem [shape: f32[2,1024], index: 5, kind: output, shape index: {}]
  %s6 = sld [smem:[#allocation0]]
  $region30: #{neck_decoder_forward.1} parent=0
    _
  %s8 = ssub.s32 1, %s6
  %s9 = scalar_select 0, %s8, %s6
  // Predicated region
  $region2: #{neck_decoder_forward.1} parent=0 // pred_check
    _
  $region3: #{neck_decoder_forward.1} parent=0 // pred_check_branch
    %11 = sbr.rel (0) target = $region5
  $region4: #{neck_decoder_forward.1} parent=0 // pred_region
    _
  $region5: #{neck_decoder_forward.1} parent=0 // pred_fallthru
    _
  // Predicated region
  $region6: #{neck_decoder_forward.1} parent=0 // pred_check
    _
  $region7: #{neck_decoder_forward.1} parent=0 // pred_check_branch
    %13 = sbr.rel (0) target = $region9
  $region8: #{neck_decoder_forward.1} parent=0 // pred_region
    _
  $region9: #{neck_decoder_forward.1} parent=0 // pred_fallthru
    _
  // Predicated region
  $region10: #{neck_decoder_forward.1} parent=0 // pred_check
    _
  $region11: #{neck_decoder_forward.1} parent=0 // pred_check_branch
    %15 = sbr.rel (0) target = $region13
  $region12: #{neck_decoder_forward.1} parent=0 // pred_region
    _
  $region13: #{neck_decoder_forward.1} parent=0 // pred_fallthru
    _
  // Predicated region
  $region14: #{neck_decoder_forward.1} parent=0 // pred_check
    _
  $region15: #{neck_decoder_forward.1} parent=0 // pred_check_branch
    %17 = sbr.rel (0) target = $region17
  $region16: #{neck_decoder_forward.1} parent=0 // pred_region
    _
  $region17: #{neck_decoder_forward.1} parent=0 // pred_fallthru
    _
  // Predicated region
  $region18: #{neck_decoder_forward.1} parent=0 // pred_check
    _
  $region19: #{neck_decoder_forward.1} parent=0 // pred_check_branch
    %19 = sbr.rel (0) target = $region21
  $region20: #{neck_decoder_forward.1} parent=0 // pred_region
    _
  $region21: #{neck_decoder_forward.1} parent=0 // pred_fallthru
    _
  %v20 = vld [vmem:[%s0] sm:$0x3]
  %v21 = vld [vmem:[%s1] sm:$0xff]
  %v22 = vld [vmem:[%s1 + $0x8] sm:$0xff]
  %v23 = vld [vmem:[%s1 + $0x10] sm:$0xff]
  %v24 = vld [vmem:[%s1 + $0x18] sm:$0xff]
  %v25 = vld [vmem:[%s1 + $0x20] sm:$0xff]
  %v26 = vld [vmem:[%s1 + $0x28] sm:$0xff]
  %v27 = vld [vmem:[%s1 + $0x30] sm:$0xff]
  %v28 = vld [vmem:[%s1 + $0x38] sm:$0xff]
  %v29 = vld [vmem:[%s1 + $0x40] sm:$0xff]
  %v30 = vld [vmem:[%s1 + $0x48] sm:$0xff]
  %v31 = vld [vmem:[%s1 + $0x50] sm:$0xff]
  %v32 = vld [vmem:[%s1 + $0x58] sm:$0xff]
  %v33 = vld [vmem:[%s1 + $0x60] sm:$0xff]
  %v34 = vld [vmem:[%s1 + $0x68] sm:$0xff]
  %v35 = vld [vmem:[%s1 + $0x70] sm:$0xff]
  %v36 = vld [vmem:[%s1 + $0x78] sm:$0xff]
  %v37 = vld [vmem:[%s1 + $0x80] sm:$0xff]
  %v38 = vld [vmem:[%s1 + $0x88] sm:$0xff]
  %v39 = vld [vmem:[%s1 + $0x90] sm:$0xff]
  %v40 = vld [vmem:[%s1 + $0x98] sm:$0xff]
  %v41 = vld [vmem:[%s1 + $0xa0] sm:$0xff]
  %v42 = vld [vmem:[%s1 + $0xa8] sm:$0xff]
  %v43 = vld [vmem:[%s1 + $0xb0] sm:$0xff]
  %v44 = vld [vmem:[%s1 + $0xb8] sm:$0xff]
  %v45 = vld [vmem:[%s1 + $0xc0] sm:$0xff]
  %v46 = vld [vmem:[%s1 + $0xc8] sm:$0xff]
  %v47 = vld [vmem:[%s1 + $0xd0] sm:$0xff]
  %v48 = vld [vmem:[%s1 + $0xd8] sm:$0xff]
  %v49 = vld [vmem:[%s1 + $0xe0] sm:$0xff]
  %v50 = vld [vmem:[%s1 + $0xe8] sm:$0xff]
  %v51 = vld [vmem:[%s1 + $0xf0] sm:$0xff]
  %v52 = vld [vmem:[%s1 + $0xf8] sm:$0xff]
  %v53 = vld [vmem:[%s2] sm:$0xff]
  %v55 = vperm.slane %v53, 0
  %v56 = vperm.slane %v53, 1
  %v57 = vperm.slane %v53, 2
  %v58 = vperm.slane %v53, 3
  %v59 = vperm.slane %v53, 4
  %v60 = vperm.slane %v53, 5
  %v61 = vperm.slane %v53, 6
  %v62 = vperm.slane %v53, 7
  %vm71 = vcmask 261120
  %v73 = vsel %vm71, %v20, 0
  %75 = vmatpush.msra.mxu0 0.0
  %76 = vmatpush.msra.mxu0 0.0
  %77 = vmatpush.msra.mxu0 0.0
  %78 = vmatpush.msra.mxu0 0.0
  %79 = vmatpush.msra.mxu0 0.0
  %80 = vmatpush.msra.mxu0 0.0
  %81 = vmatpush.msra.mxu0 0.0
  %82 = vmatpush.msra.mxu0 0.0
  %83 = vmatpush.msra.mxu0 0.0
  %84 = vmatpush.msra.mxu0 0.0
  %85 = vmatpush.msra.mxu0 0.0
  %86 = vmatpush.msra.mxu0 0.0
  %87 = vmatpush.msra.mxu0 %v45
  %88 = vmatpush.msra.mxu0 %v37
  %89 = vmatpush.msra.mxu0 %v29
  %90 = vmatpush.msra.mxu0 %v21
  %91 = vmatmul.f32.gmra.mxu0 %v73
  %v92 = vpop.f32.mrf.mxu0
  %v93 = vadd.f32 %v55, %v92
  %94 = vdwg.mxu0
  %95 = vmatpush.msra.mxu0 0.0
  %96 = vmatpush.msra.mxu0 0.0
  %97 = vmatpush.msra.mxu0 0.0
  %98 = vmatpush.msra.mxu0 0.0
  %99 = vmatpush.msra.mxu0 0.0
  %100 = vmatpush.msra.mxu0 0.0
  %101 = vmatpush.msra.mxu0 0.0
  %102 = vmatpush.msra.mxu0 0.0
  %103 = vmatpush.msra.mxu0 0.0
  %104 = vmatpush.msra.mxu0 0.0
  %105 = vmatpush.msra.mxu0 0.0
  %106 = vmatpush.msra.mxu0 0.0
  %107 = vmatpush.msra.mxu0 %v46
  %108 = vmatpush.msra.mxu0 %v38
  %109 = vmatpush.msra.mxu0 %v30
  %110 = vmatpush.msra.mxu0 %v22
  %111 = vmatmul.f32.gmra.mxu0 %v73
  %v112 = vpop.f32.mrf.mxu0
  %v113 = vadd.f32 %v56, %v112
  %114 = vdwg.mxu0
  %115 = vmatpush.msra.mxu0 0.0
  %116 = vmatpush.msra.mxu0 0.0
  %117 = vmatpush.msra.mxu0 0.0
  %118 = vmatpush.msra.mxu0 0.0
  %119 = vmatpush.msra.mxu0 0.0
  %120 = vmatpush.msra.mxu0 0.0
  %121 = vmatpush.msra.mxu0 0.0
  %122 = vmatpush.msra.mxu0 0.0
  %123 = vmatpush.msra.mxu0 0.0
  %124 = vmatpush.msra.mxu0 0.0
  %125 = vmatpush.msra.mxu0 0.0
  %126 = vmatpush.msra.mxu0 0.0
  %127 = vmatpush.msra.mxu0 %v47
  %128 = vmatpush.msra.mxu0 %v39
  %129 = vmatpush.msra.mxu0 %v31
  %130 = vmatpush.msra.mxu0 %v23
  %131 = vmatmul.f32.gmra.mxu0 %v73
  %v132 = vpop.f32.mrf.mxu0
  %v133 = vadd.f32 %v57, %v132
  %134 = vdwg.mxu0
  %135 = vmatpush.msra.mxu0 0.0
  %136 = vmatpush.msra.mxu0 0.0
  %137 = vmatpush.msra.mxu0 0.0
  %138 = vmatpush.msra.mxu0 0.0
  %139 = vmatpush.msra.mxu0 0.0
  %140 = vmatpush.msra.mxu0 0.0
  %141 = vmatpush.msra.mxu0 0.0
  %142 = vmatpush.msra.mxu0 0.0
  %143 = vmatpush.msra.mxu0 0.0
  %144 = vmatpush.msra.mxu0 0.0
  %145 = vmatpush.msra.mxu0 0.0
  %146 = vmatpush.msra.mxu0 0.0
  %147 = vmatpush.msra.mxu0 %v48
  %148 = vmatpush.msra.mxu0 %v40
  %149 = vmatpush.msra.mxu0 %v32
  %150 = vmatpush.msra.mxu0 %v24
  %151 = vmatmul.f32.gmra.mxu0 %v73
  %v152 = vpop.f32.mrf.mxu0
  %v153 = vadd.f32 %v58, %v152
  %154 = vdwg.mxu0
  %155 = vmatpush.msra.mxu0 0.0
  %156 = vmatpush.msra.mxu0 0.0
  %157 = vmatpush.msra.mxu0 0.0
  %158 = vmatpush.msra.mxu0 0.0
  %159 = vmatpush.msra.mxu0 0.0
  %160 = vmatpush.msra.mxu0 0.0
  %161 = vmatpush.msra.mxu0 0.0
  %162 = vmatpush.msra.mxu0 0.0
  %163 = vmatpush.msra.mxu0 0.0
  %164 = vmatpush.msra.mxu0 0.0
  %165 = vmatpush.msra.mxu0 0.0
  %166 = vmatpush.msra.mxu0 0.0
  %167 = vmatpush.msra.mxu0 %v49
  %168 = vmatpush.msra.mxu0 %v41
  %169 = vmatpush.msra.mxu0 %v33
  %170 = vmatpush.msra.mxu0 %v25
  %171 = vmatmul.f32.gmra.mxu0 %v73
  %v172 = vpop.f32.mrf.mxu0
  %v173 = vadd.f32 %v59, %v172
  %174 = vdwg.mxu0
  %175 = vmatpush.msra.mxu0 0.0
  %176 = vmatpush.msra.mxu0 0.0
  %177 = vmatpush.msra.mxu0 0.0
  %178 = vmatpush.msra.mxu0 0.0
  %179 = vmatpush.msra.mxu0 0.0
  %180 = vmatpush.msra.mxu0 0.0
  %181 = vmatpush.msra.mxu0 0.0
  %182 = vmatpush.msra.mxu0 0.0
  %183 = vmatpush.msra.mxu0 0.0
  %184 = vmatpush.msra.mxu0 0.0
  %185 = vmatpush.msra.mxu0 0.0
  %186 = vmatpush.msra.mxu0 0.0
  %187 = vmatpush.msra.mxu0 %v50
  %188 = vmatpush.msra.mxu0 %v42
  %189 = vmatpush.msra.mxu0 %v34
  %190 = vmatpush.msra.mxu0 %v26
  %191 = vmatmul.f32.gmra.mxu0 %v73
  %v192 = vpop.f32.mrf.mxu0
  %v193 = vadd.f32 %v60, %v192
  %194 = vdwg.mxu0
  %195 = vmatpush.msra.mxu0 0.0
  %196 = vmatpush.msra.mxu0 0.0
  %197 = vmatpush.msra.mxu0 0.0
  %198 = vmatpush.msra.mxu0 0.0
  %199 = vmatpush.msra.mxu0 0.0
  %200 = vmatpush.msra.mxu0 0.0
  %201 = vmatpush.msra.mxu0 0.0
  %202 = vmatpush.msra.mxu0 0.0
  %203 = vmatpush.msra.mxu0 0.0
  %204 = vmatpush.msra.mxu0 0.0
  %205 = vmatpush.msra.mxu0 0.0
  %206 = vmatpush.msra.mxu0 0.0
  %207 = vmatpush.msra.mxu0 %v51
  %208 = vmatpush.msra.mxu0 %v43
  %209 = vmatpush.msra.mxu0 %v35
  %210 = vmatpush.msra.mxu0 %v27
  %211 = vmatmul.f32.gmra.mxu0 %v73
  %v212 = vpop.f32.mrf.mxu0
  %v213 = vadd.f32 %v61, %v212
  %214 = vdwg.mxu0
  %215 = vmatpush.msra.mxu0 0.0
  %216 = vmatpush.msra.mxu0 0.0
  %217 = vmatpush.msra.mxu0 0.0
  %218 = vmatpush.msra.mxu0 0.0
  %219 = vmatpush.msra.mxu0 0.0
  %220 = vmatpush.msra.mxu0 0.0
  %221 = vmatpush.msra.mxu0 0.0
  %222 = vmatpush.msra.mxu0 0.0
  %223 = vmatpush.msra.mxu0 0.0
  %224 = vmatpush.msra.mxu0 0.0
  %225 = vmatpush.msra.mxu0 0.0
  %226 = vmatpush.msra.mxu0 0.0
  %227 = vmatpush.msra.mxu0 %v52
  %228 = vmatpush.msra.mxu0 %v44
  %229 = vmatpush.msra.mxu0 %v36
  %230 = vmatpush.msra.mxu0 %v28
  %231 = vmatmul.f32.gmra.mxu0 %v73
  %v232 = vpop.f32.mrf.mxu0
  %v233 = vadd.f32 %v62, %v232
  %234 = vdwg.mxu0
  %v235 = vld [vmem:[%s3] sm:$0xff]
  %v236 = vld [vmem:[%s3 + $0x8] sm:$0xff]
  %v237 = vld [vmem:[%s3 + $0x10] sm:$0xff]
  %v238 = vld [vmem:[%s3 + $0x18] sm:$0xff]
  %v239 = vld [vmem:[%s3 + $0x20] sm:$0xff]
  %v240 = vld [vmem:[%s3 + $0x28] sm:$0xff]
  %v241 = vld [vmem:[%s3 + $0x30] sm:$0xff]
  %v242 = vld [vmem:[%s3 + $0x38] sm:$0xff]
  %v243 = vld [vmem:[%s3 + $0x40] sm:$0xff]
  %v244 = vld [vmem:[%s3 + $0x48] sm:$0xff]
  %v245 = vld [vmem:[%s3 + $0x50] sm:$0xff]
  %v246 = vld [vmem:[%s3 + $0x58] sm:$0xff]
  %v247 = vld [vmem:[%s3 + $0x60] sm:$0xff]
  %v248 = vld [vmem:[%s3 + $0x68] sm:$0xff]
  %v249 = vld [vmem:[%s3 + $0x70] sm:$0xff]
  %v250 = vld [vmem:[%s3 + $0x78] sm:$0xff]
  %v251 = vld [vmem:[%s3 + $0x80] sm:$0xff]
  %v252 = vld [vmem:[%s3 + $0x88] sm:$0xff]
  %v253 = vld [vmem:[%s3 + $0x90] sm:$0xff]
  %v254 = vld [vmem:[%s3 + $0x98] sm:$0xff]
  %v255 = vld [vmem:[%s3 + $0xa0] sm:$0xff]
  %v256 = vld [vmem:[%s3 + $0xa8] sm:$0xff]
  %v257 = vld [vmem:[%s3 + $0xb0] sm:$0xff]
  %v258 = vld [vmem:[%s3 + $0xb8] sm:$0xff]
  %v259 = vld [vmem:[%s3 + $0xc0] sm:$0xff]
  %v260 = vld [vmem:[%s3 + $0xc8] sm:$0xff]
  %v261 = vld [vmem:[%s3 + $0xd0] sm:$0xff]
  %v262 = vld [vmem:[%s3 + $0xd8] sm:$0xff]
  %v263 = vld [vmem:[%s3 + $0xe0] sm:$0xff]
  %v264 = vld [vmem:[%s3 + $0xe8] sm:$0xff]
  %v265 = vld [vmem:[%s3 + $0xf0] sm:$0xff]
  %v266 = vld [vmem:[%s3 + $0xf8] sm:$0xff]
  %v267 = vld [vmem:[%s3 + $0x100] sm:$0xff]
  %v268 = vld [vmem:[%s3 + $0x108] sm:$0xff]
  %v269 = vld [vmem:[%s3 + $0x110] sm:$0xff]
  %v270 = vld [vmem:[%s3 + $0x118] sm:$0xff]
  %v271 = vld [vmem:[%s3 + $0x120] sm:$0xff]
  %v272 = vld [vmem:[%s3 + $0x128] sm:$0xff]
  %v273 = vld [vmem:[%s3 + $0x130] sm:$0xff]
  %v274 = vld [vmem:[%s3 + $0x138] sm:$0xff]
  %v275 = vld [vmem:[%s3 + $0x140] sm:$0xff]
  %v276 = vld [vmem:[%s3 + $0x148] sm:$0xff]
  %v277 = vld [vmem:[%s3 + $0x150] sm:$0xff]
  %v278 = vld [vmem:[%s3 + $0x158] sm:$0xff]
  %v279 = vld [vmem:[%s3 + $0x160] sm:$0xff]
  %v280 = vld [vmem:[%s3 + $0x168] sm:$0xff]
  %v281 = vld [vmem:[%s3 + $0x170] sm:$0xff]
  %v282 = vld [vmem:[%s3 + $0x178] sm:$0xff]
  %v283 = vld [vmem:[%s3 + $0x180] sm:$0xff]
  %v284 = vld [vmem:[%s3 + $0x188] sm:$0xff]
  %v285 = vld [vmem:[%s3 + $0x190] sm:$0xff]
  %v286 = vld [vmem:[%s3 + $0x198] sm:$0xff]
  %v287 = vld [vmem:[%s3 + $0x1a0] sm:$0xff]
  %v288 = vld [vmem:[%s3 + $0x1a8] sm:$0xff]
  %v289 = vld [vmem:[%s3 + $0x1b0] sm:$0xff]
  %v290 = vld [vmem:[%s3 + $0x1b8] sm:$0xff]
  %v291 = vld [vmem:[%s3 + $0x1c0] sm:$0xff]
  %v292 = vld [vmem:[%s3 + $0x1c8] sm:$0xff]
  %v293 = vld [vmem:[%s3 + $0x1d0] sm:$0xff]
  %v294 = vld [vmem:[%s3 + $0x1d8] sm:$0xff]
  %v295 = vld [vmem:[%s3 + $0x1e0] sm:$0xff]
  %v296 = vld [vmem:[%s3 + $0x1e8] sm:$0xff]
  %v297 = vld [vmem:[%s3 + $0x1f0] sm:$0xff]
  %v298 = vld [vmem:[%s3 + $0x1f8] sm:$0xff]
  %v299 = vld [vmem:[%s3 + $0x200] sm:$0xff]
  %v300 = vld [vmem:[%s3 + $0x208] sm:$0xff]
  %v301 = vld [vmem:[%s3 + $0x210] sm:$0xff]
  %v302 = vld [vmem:[%s3 + $0x218] sm:$0xff]
  %v303 = vld [vmem:[%s3 + $0x220] sm:$0xff]
  %v304 = vld [vmem:[%s3 + $0x228] sm:$0xff]
  %v305 = vld [vmem:[%s3 + $0x230] sm:$0xff]
  %v306 = vld [vmem:[%s3 + $0x238] sm:$0xff]
  %v307 = vld [vmem:[%s3 + $0x240] sm:$0xff]
  %v308 = vld [vmem:[%s3 + $0x248] sm:$0xff]
  %v309 = vld [vmem:[%s3 + $0x250] sm:$0xff]
  %v310 = vld [vmem:[%s3 + $0x258] sm:$0xff]
  %v311 = vld [vmem:[%s3 + $0x260] sm:$0xff]
  %v312 = vld [vmem:[%s3 + $0x268] sm:$0xff]
  %v313 = vld [vmem:[%s3 + $0x270] sm:$0xff]
  %v314 = vld [vmem:[%s3 + $0x278] sm:$0xff]
  %v315 = vld [vmem:[%s3 + $0x280] sm:$0xff]
  %v316 = vld [vmem:[%s3 + $0x288] sm:$0xff]
  %v317 = vld [vmem:[%s3 + $0x290] sm:$0xff]
  %v318 = vld [vmem:[%s3 + $0x298] sm:$0xff]
  %v319 = vld [vmem:[%s3 + $0x2a0] sm:$0xff]
  %v320 = vld [vmem:[%s3 + $0x2a8] sm:$0xff]
  %v321 = vld [vmem:[%s3 + $0x2b0] sm:$0xff]
  %v322 = vld [vmem:[%s3 + $0x2b8] sm:$0xff]
  %v323 = vld [vmem:[%s3 + $0x2c0] sm:$0xff]
  %v324 = vld [vmem:[%s3 + $0x2c8] sm:$0xff]
  %v325 = vld [vmem:[%s3 + $0x2d0] sm:$0xff]
  %v326 = vld [vmem:[%s3 + $0x2d8] sm:$0xff]
  %v327 = vld [vmem:[%s3 + $0x2e0] sm:$0xff]
  %v328 = vld [vmem:[%s3 + $0x2e8] sm:$0xff]
  %v329 = vld [vmem:[%s3 + $0x2f0] sm:$0xff]
  %v330 = vld [vmem:[%s3 + $0x2f8] sm:$0xff]
  %v331 = vld [vmem:[%s3 + $0x300] sm:$0xff]
  %v332 = vld [vmem:[%s3 + $0x308] sm:$0xff]
  %v333 = vld [vmem:[%s3 + $0x310] sm:$0xff]
  %v334 = vld [vmem:[%s3 + $0x318] sm:$0xff]
  %v335 = vld [vmem:[%s3 + $0x320] sm:$0xff]
  %v336 = vld [vmem:[%s3 + $0x328] sm:$0xff]
  %v337 = vld [vmem:[%s3 + $0x330] sm:$0xff]
  %v338 = vld [vmem:[%s3 + $0x338] sm:$0xff]
  %v339 = vld [vmem:[%s3 + $0x340] sm:$0xff]
  %v340 = vld [vmem:[%s3 + $0x348] sm:$0xff]
  %v341 = vld [vmem:[%s3 + $0x350] sm:$0xff]
  %v342 = vld [vmem:[%s3 + $0x358] sm:$0xff]
  %v343 = vld [vmem:[%s3 + $0x360] sm:$0xff]
  %v344 = vld [vmem:[%s3 + $0x368] sm:$0xff]
  %v345 = vld [vmem:[%s3 + $0x370] sm:$0xff]
  %v346 = vld [vmem:[%s3 + $0x378] sm:$0xff]
  %v347 = vld [vmem:[%s3 + $0x380] sm:$0xff]
  %v348 = vld [vmem:[%s3 + $0x388] sm:$0xff]
  %v349 = vld [vmem:[%s3 + $0x390] sm:$0xff]
  %v350 = vld [vmem:[%s3 + $0x398] sm:$0xff]
  %v351 = vld [vmem:[%s3 + $0x3a0] sm:$0xff]
  %v352 = vld [vmem:[%s3 + $0x3a8] sm:$0xff]
  %v353 = vld [vmem:[%s3 + $0x3b0] sm:$0xff]
  %v354 = vld [vmem:[%s3 + $0x3b8] sm:$0xff]
  %v355 = vld [vmem:[%s3 + $0x3c0] sm:$0xff]
  %v356 = vld [vmem:[%s3 + $0x3c8] sm:$0xff]
  %v357 = vld [vmem:[%s3 + $0x3d0] sm:$0xff]
  %v358 = vld [vmem:[%s3 + $0x3d8] sm:$0xff]
  %v359 = vld [vmem:[%s3 + $0x3e0] sm:$0xff]
  %v360 = vld [vmem:[%s3 + $0x3e8] sm:$0xff]
  %v361 = vld [vmem:[%s3 + $0x3f0] sm:$0xff]
  %v362 = vld [vmem:[%s3 + $0x3f8] sm:$0xff]
  %v363 = vld [vmem:[%s4] sm:$0xff]
  %v364 = vld [vmem:[%s4 + $0x8] sm:$0xff]
  %v365 = vld [vmem:[%s4 + $0x10] sm:$0xff]
  %v366 = vld [vmem:[%s4 + $0x18] sm:$0xff]
  %v367 = vld [vmem:[%s4 + $0x20] sm:$0xff]
  %v368 = vld [vmem:[%s4 + $0x28] sm:$0xff]
  %v369 = vld [vmem:[%s4 + $0x30] sm:$0xff]
  %v370 = vld [vmem:[%s4 + $0x38] sm:$0xff]
  %v371 = vld [vmem:[%s4 + $0x40] sm:$0xff]
  %v372 = vld [vmem:[%s4 + $0x48] sm:$0xff]
  %v373 = vld [vmem:[%s4 + $0x50] sm:$0xff]
  %v374 = vld [vmem:[%s4 + $0x58] sm:$0xff]
  %v375 = vld [vmem:[%s4 + $0x60] sm:$0xff]
  %v376 = vld [vmem:[%s4 + $0x68] sm:$0xff]
  %v377 = vld [vmem:[%s4 + $0x70] sm:$0xff]
  %v378 = vld [vmem:[%s4 + $0x78] sm:$0xff]
  %379 = vmatpush.msra.mxu0 %v250
  %380 = vmatpush.msra.mxu0 %v249
  %381 = vmatpush.msra.mxu0 %v248
  %382 = vmatpush.msra.mxu0 %v247
  %383 = vmatpush.msra.mxu0 %v246
  %384 = vmatpush.msra.mxu0 %v245
  %385 = vmatpush.msra.mxu0 %v244
  %386 = vmatpush.msra.mxu0 %v243
  %387 = vmatpush.msra.mxu0 %v242
  %388 = vmatpush.msra.mxu0 %v241
  %389 = vmatpush.msra.mxu0 %v240
  %390 = vmatpush.msra.mxu0 %v239
  %391 = vmatpush.msra.mxu0 %v238
  %392 = vmatpush.msra.mxu0 %v237
  %393 = vmatpush.msra.mxu0 %v236
  %394 = vmatpush.msra.mxu0 %v235
  %395 = vmatmul.f32.gmra.mxu0 %v93
  %v396 = vpop.f32.mrf.mxu0
  %v397 = vadd.f32 0.0, %v396
  %398 = vdwg.mxu0
  %399 = vmatpush.msra.mxu0 %v266
  %400 = vmatpush.msra.mxu0 %v265
  %401 = vmatpush.msra.mxu0 %v264
  %402 = vmatpush.msra.mxu0 %v263
  %403 = vmatpush.msra.mxu0 %v262
  %404 = vmatpush.msra.mxu0 %v261
  %405 = vmatpush.msra.mxu0 %v260
  %406 = vmatpush.msra.mxu0 %v259
  %407 = vmatpush.msra.mxu0 %v258
  %408 = vmatpush.msra.mxu0 %v257
  %409 = vmatpush.msra.mxu0 %v256
  %410 = vmatpush.msra.mxu0 %v255
  %411 = vmatpush.msra.mxu0 %v254
  %412 = vmatpush.msra.mxu0 %v253
  %413 = vmatpush.msra.mxu0 %v252
  %414 = vmatpush.msra.mxu0 %v251
  %415 = vmatmul.f32.gmra.mxu0 %v113
  %v416 = vpop.f32.mrf.mxu0
  %v417 = vadd.f32 %v397, %v416
  %418 = vdwg.mxu0
  %419 = vmatpush.msra.mxu0 %v282
  %420 = vmatpush.msra.mxu0 %v281
  %421 = vmatpush.msra.mxu0 %v280
  %422 = vmatpush.msra.mxu0 %v279
  %423 = vmatpush.msra.mxu0 %v278
  %424 = vmatpush.msra.mxu0 %v277
  %425 = vmatpush.msra.mxu0 %v276
  %426 = vmatpush.msra.mxu0 %v275
  %427 = vmatpush.msra.mxu0 %v274
  %428 = vmatpush.msra.mxu0 %v273
  %429 = vmatpush.msra.mxu0 %v272
  %430 = vmatpush.msra.mxu0 %v271
  %431 = vmatpush.msra.mxu0 %v270
  %432 = vmatpush.msra.mxu0 %v269
  %433 = vmatpush.msra.mxu0 %v268
  %434 = vmatpush.msra.mxu0 %v267
  %435 = vmatmul.f32.gmra.mxu0 %v133
  %v436 = vpop.f32.mrf.mxu0
  %v437 = vadd.f32 %v417, %v436
  %438 = vdwg.mxu0
  %439 = vmatpush.msra.mxu0 %v298
  %440 = vmatpush.msra.mxu0 %v297
  %441 = vmatpush.msra.mxu0 %v296
  %442 = vmatpush.msra.mxu0 %v295
  %443 = vmatpush.msra.mxu0 %v294
  %444 = vmatpush.msra.mxu0 %v293
  %445 = vmatpush.msra.mxu0 %v292
  %446 = vmatpush.msra.mxu0 %v291
  %447 = vmatpush.msra.mxu0 %v290
  %448 = vmatpush.msra.mxu0 %v289
  %449 = vmatpush.msra.mxu0 %v288
  %450 = vmatpush.msra.mxu0 %v287
  %451 = vmatpush.msra.mxu0 %v286
  %452 = vmatpush.msra.mxu0 %v285
  %453 = vmatpush.msra.mxu0 %v284
  %454 = vmatpush.msra.mxu0 %v283
  %455 = vmatmul.f32.gmra.mxu0 %v153
  %v456 = vpop.f32.mrf.mxu0
  %v457 = vadd.f32 %v437, %v456
  %458 = vdwg.mxu0
  %459 = vmatpush.msra.mxu0 %v314
  %460 = vmatpush.msra.mxu0 %v313
  %461 = vmatpush.msra.mxu0 %v312
  %462 = vmatpush.msra.mxu0 %v311
  %463 = vmatpush.msra.mxu0 %v310
  %464 = vmatpush.msra.mxu0 %v309
  %465 = vmatpush.msra.mxu0 %v308
  %466 = vmatpush.msra.mxu0 %v307
  %467 = vmatpush.msra.mxu0 %v306
  %468 = vmatpush.msra.mxu0 %v305
  %469 = vmatpush.msra.mxu0 %v304
  %470 = vmatpush.msra.mxu0 %v303
  %471 = vmatpush.msra.mxu0 %v302
  %472 = vmatpush.msra.mxu0 %v301
  %473 = vmatpush.msra.mxu0 %v300
  %474 = vmatpush.msra.mxu0 %v299
  %475 = vmatmul.f32.gmra.mxu0 %v173
  %v476 = vpop.f32.mrf.mxu0
  %v477 = vadd.f32 %v457, %v476
  %478 = vdwg.mxu0
  %479 = vmatpush.msra.mxu0 %v330
  %480 = vmatpush.msra.mxu0 %v329
  %481 = vmatpush.msra.mxu0 %v328
  %482 = vmatpush.msra.mxu0 %v327
  %483 = vmatpush.msra.mxu0 %v326
  %484 = vmatpush.msra.mxu0 %v325
  %485 = vmatpush.msra.mxu0 %v324
  %486 = vmatpush.msra.mxu0 %v323
  %487 = vmatpush.msra.mxu0 %v322
  %488 = vmatpush.msra.mxu0 %v321
  %489 = vmatpush.msra.mxu0 %v320
  %490 = vmatpush.msra.mxu0 %v319
  %491 = vmatpush.msra.mxu0 %v318
  %492 = vmatpush.msra.mxu0 %v317
  %493 = vmatpush.msra.mxu0 %v316
  %494 = vmatpush.msra.mxu0 %v315
  %495 = vmatmul.f32.gmra.mxu0 %v193
  %v496 = vpop.f32.mrf.mxu0
  %v497 = vadd.f32 %v477, %v496
  %498 = vdwg.mxu0
  %499 = vmatpush.msra.mxu0 %v346
  %500 = vmatpush.msra.mxu0 %v345
  %501 = vmatpush.msra.mxu0 %v344
  %502 = vmatpush.msra.mxu0 %v343
  %503 = vmatpush.msra.mxu0 %v342
  %504 = vmatpush.msra.mxu0 %v341
  %505 = vmatpush.msra.mxu0 %v340
  %506 = vmatpush.msra.mxu0 %v339
  %507 = vmatpush.msra.mxu0 %v338
  %508 = vmatpush.msra.mxu0 %v337
  %509 = vmatpush.msra.mxu0 %v336
  %510 = vmatpush.msra.mxu0 %v335
  %511 = vmatpush.msra.mxu0 %v334
  %512 = vmatpush.msra.mxu0 %v333
  %513 = vmatpush.msra.mxu0 %v332
  %514 = vmatpush.msra.mxu0 %v331
  %515 = vmatmul.f32.gmra.mxu0 %v213
  %v516 = vpop.f32.mrf.mxu0
  %v517 = vadd.f32 %v497, %v516
  %518 = vdwg.mxu0
  %519 = vmatpush.msra.mxu0 %v362
  %520 = vmatpush.msra.mxu0 %v361
  %521 = vmatpush.msra.mxu0 %v360
  %522 = vmatpush.msra.mxu0 %v359
  %523 = vmatpush.msra.mxu0 %v358
  %524 = vmatpush.msra.mxu0 %v357
  %525 = vmatpush.msra.mxu0 %v356
  %526 = vmatpush.msra.mxu0 %v355
  %527 = vmatpush.msra.mxu0 %v354
  %528 = vmatpush.msra.mxu0 %v353
  %529 = vmatpush.msra.mxu0 %v352
  %530 = vmatpush.msra.mxu0 %v351
  %531 = vmatpush.msra.mxu0 %v350
  %532 = vmatpush.msra.mxu0 %v349
  %533 = vmatpush.msra.mxu0 %v348
  %534 = vmatpush.msra.mxu0 %v347
  %535 = vmatmul.f32.gmra.mxu0 %v233
  %v536 = vpop.f32.mrf.mxu0
  %v537 = vadd.f32 %v517, %v536
  %538 = vdwg.mxu0
  %vm539 = vcmask 130048
  %v541 = vsel %vm539, %v537, 0
  %543 = vmatpush.msra.mxu0 0.0
  %544 = vmatpush.msra.mxu0 0.0
  %545 = vmatpush.msra.mxu0 0.0
  %546 = vmatpush.msra.mxu0 0.0
  %547 = vmatpush.msra.mxu0 0.0
  %548 = vmatpush.msra.mxu0 0.0
  %549 = vmatpush.msra.mxu0 0.0
  %550 = vmatpush.msra.mxu0 0.0
  %551 = vmatpush.msra.mxu0 0.0
  %552 = vmatpush.msra.mxu0 0.0
  %553 = vmatpush.msra.mxu0 0.0
  %554 = vmatpush.msra.mxu0 0.0
  %555 = vmatpush.msra.mxu0 0.0
  %556 = vmatpush.msra.mxu0 0.0
  %557 = vmatpush.msra.mxu0 %v371
  %558 = vmatpush.msra.mxu0 %v363
  %559 = vmatmul.f32.gmra.mxu0 %v541
  %v560 = vpop.f32.mrf.mxu0
  %v561 = vadd.f32 0.0, %v560
  %562 = vdwg.mxu0
  %563 = vmatpush.msra.mxu0 0.0
  %564 = vmatpush.msra.mxu0 0.0
  %565 = vmatpush.msra.mxu0 0.0
  %566 = vmatpush.msra.mxu0 0.0
  %567 = vmatpush.msra.mxu0 0.0
  %568 = vmatpush.msra.mxu0 0.0
  %569 = vmatpush.msra.mxu0 0.0
  %570 = vmatpush.msra.mxu0 0.0
  %571 = vmatpush.msra.mxu0 0.0
  %572 = vmatpush.msra.mxu0 0.0
  %573 = vmatpush.msra.mxu0 0.0
  %574 = vmatpush.msra.mxu0 0.0
  %575 = vmatpush.msra.mxu0 0.0
  %576 = vmatpush.msra.mxu0 0.0
  %577 = vmatpush.msra.mxu0 %v372
  %578 = vmatpush.msra.mxu0 %v364
  %579 = vmatmul.f32.gmra.mxu0 %v541
  %v580 = vpop.f32.mrf.mxu0
  %v581 = vadd.f32 0.0, %v580
  %582 = vdwg.mxu0
  %583 = vmatpush.msra.mxu0 0.0
  %584 = vmatpush.msra.mxu0 0.0
  %585 = vmatpush.msra.mxu0 0.0
  %586 = vmatpush.msra.mxu0 0.0
  %587 = vmatpush.msra.mxu0 0.0
  %588 = vmatpush.msra.mxu0 0.0
  %589 = vmatpush.msra.mxu0 0.0
  %590 = vmatpush.msra.mxu0 0.0
  %591 = vmatpush.msra.mxu0 0.0
  %592 = vmatpush.msra.mxu0 0.0
  %593 = vmatpush.msra.mxu0 0.0
  %594 = vmatpush.msra.mxu0 0.0
  %595 = vmatpush.msra.mxu0 0.0
  %596 = vmatpush.msra.mxu0 0.0
  %597 = vmatpush.msra.mxu0 %v373
  %598 = vmatpush.msra.mxu0 %v365
  %599 = vmatmul.f32.gmra.mxu0 %v541
  %v600 = vpop.f32.mrf.mxu0
  %v601 = vadd.f32 0.0, %v600
  %602 = vdwg.mxu0
  %603 = vmatpush.msra.mxu0 0.0
  %604 = vmatpush.msra.mxu0 0.0
  %605 = vmatpush.msra.mxu0 0.0
  %606 = vmatpush.msra.mxu0 0.0
  %607 = vmatpush.msra.mxu0 0.0
  %608 = vmatpush.msra.mxu0 0.0
  %609 = vmatpush.msra.mxu0 0.0
  %610 = vmatpush.msra.mxu0 0.0
  %611 = vmatpush.msra.mxu0 0.0
  %612 = vmatpush.msra.mxu0 0.0
  %613 = vmatpush.msra.mxu0 0.0
  %614 = vmatpush.msra.mxu0 0.0
  %615 = vmatpush.msra.mxu0 0.0
  %616 = vmatpush.msra.mxu0 0.0
  %617 = vmatpush.msra.mxu0 %v374
  %618 = vmatpush.msra.mxu0 %v366
  %619 = vmatmul.f32.gmra.mxu0 %v541
  %v620 = vpop.f32.mrf.mxu0
  %v621 = vadd.f32 0.0, %v620
  %622 = vdwg.mxu0
  %623 = vmatpush.msra.mxu0 0.0
  %624 = vmatpush.msra.mxu0 0.0
  %625 = vmatpush.msra.mxu0 0.0
  %626 = vmatpush.msra.mxu0 0.0
  %627 = vmatpush.msra.mxu0 0.0
  %628 = vmatpush.msra.mxu0 0.0
  %629 = vmatpush.msra.mxu0 0.0
  %630 = vmatpush.msra.mxu0 0.0
  %631 = vmatpush.msra.mxu0 0.0
  %632 = vmatpush.msra.mxu0 0.0
  %633 = vmatpush.msra.mxu0 0.0
  %634 = vmatpush.msra.mxu0 0.0
  %635 = vmatpush.msra.mxu0 0.0
  %636 = vmatpush.msra.mxu0 0.0
  %637 = vmatpush.msra.mxu0 %v375
  %638 = vmatpush.msra.mxu0 %v367
  %639 = vmatmul.f32.gmra.mxu0 %v541
  %v640 = vpop.f32.mrf.mxu0
  %v641 = vadd.f32 0.0, %v640
  %642 = vdwg.mxu0
  %643 = vmatpush.msra.mxu0 0.0
  %644 = vmatpush.msra.mxu0 0.0
  %645 = vmatpush.msra.mxu0 0.0
  %646 = vmatpush.msra.mxu0 0.0
  %647 = vmatpush.msra.mxu0 0.0
  %648 = vmatpush.msra.mxu0 0.0
  %649 = vmatpush.msra.mxu0 0.0
  %650 = vmatpush.msra.mxu0 0.0
  %651 = vmatpush.msra.mxu0 0.0
  %652 = vmatpush.msra.mxu0 0.0
  %653 = vmatpush.msra.mxu0 0.0
  %654 = vmatpush.msra.mxu0 0.0
  %655 = vmatpush.msra.mxu0 0.0
  %656 = vmatpush.msra.mxu0 0.0
  %657 = vmatpush.msra.mxu0 %v376
  %658 = vmatpush.msra.mxu0 %v368
  %659 = vmatmul.f32.gmra.mxu0 %v541
  %v660 = vpop.f32.mrf.mxu0
  %v661 = vadd.f32 0.0, %v660
  %662 = vdwg.mxu0
  %663 = vmatpush.msra.mxu0 0.0
  %664 = vmatpush.msra.mxu0 0.0
  %665 = vmatpush.msra.mxu0 0.0
  %666 = vmatpush.msra.mxu0 0.0
  %667 = vmatpush.msra.mxu0 0.0
  %668 = vmatpush.msra.mxu0 0.0
  %669 = vmatpush.msra.mxu0 0.0
  %670 = vmatpush.msra.mxu0 0.0
  %671 = vmatpush.msra.mxu0 0.0
  %672 = vmatpush.msra.mxu0 0.0
  %673 = vmatpush.msra.mxu0 0.0
  %674 = vmatpush.msra.mxu0 0.0
  %675 = vmatpush.msra.mxu0 0.0
  %676 = vmatpush.msra.mxu0 0.0
  %677 = vmatpush.msra.mxu0 %v377
  %678 = vmatpush.msra.mxu0 %v369
  %679 = vmatmul.f32.gmra.mxu0 %v541
  %v680 = vpop.f32.mrf.mxu0
  %v681 = vadd.f32 0.0, %v680
  %682 = vdwg.mxu0
  %683 = vmatpush.msra.mxu0 0.0
  %684 = vmatpush.msra.mxu0 0.0
  %685 = vmatpush.msra.mxu0 0.0
  %686 = vmatpush.msra.mxu0 0.0
  %687 = vmatpush.msra.mxu0 0.0
  %688 = vmatpush.msra.mxu0 0.0
  %689 = vmatpush.msra.mxu0 0.0
  %690 = vmatpush.msra.mxu0 0.0
  %691 = vmatpush.msra.mxu0 0.0
  %692 = vmatpush.msra.mxu0 0.0
  %693 = vmatpush.msra.mxu0 0.0
  %694 = vmatpush.msra.mxu0 0.0
  %695 = vmatpush.msra.mxu0 0.0
  %696 = vmatpush.msra.mxu0 0.0
  %697 = vmatpush.msra.mxu0 %v378
  %698 = vmatpush.msra.mxu0 %v370
  %699 = vmatmul.f32.gmra.mxu0 %v541
  %v700 = vpop.f32.mrf.mxu0
  %v701 = vadd.f32 0.0, %v700
  %702 = vdwg.mxu0
  %v703 = vsub.f32 %v93, %v561
  %v704 = vsub.f32 %v113, %v581
  %v705 = vsub.f32 %v133, %v601
  %v706 = vsub.f32 %v153, %v621
  %v707 = vsub.f32 %v173, %v641
  %v708 = vsub.f32 %v193, %v661
  %v709 = vsub.f32 %v213, %v681
  %v710 = vsub.f32 %v233, %v701
  %v711 = vmul.f32 %v703, %v703
  %v712 = vmul.f32 %v704, %v704
  %v713 = vmul.f32 %v705, %v705
  %v714 = vmul.f32 %v706, %v706
  %v715 = vmul.f32 %v707, %v707
  %v716 = vmul.f32 %v708, %v708
  %v717 = vmul.f32 %v709, %v709
  %v718 = vmul.f32 %v710, %v710
  %719 = vmatpush.msra.mxu0 %v250
  %720 = vmatpush.msra.mxu0 %v249
  %721 = vmatpush.msra.mxu0 %v248
  %722 = vmatpush.msra.mxu0 %v247
  %723 = vmatpush.msra.mxu0 %v246
  %724 = vmatpush.msra.mxu0 %v245
  %725 = vmatpush.msra.mxu0 %v244
  %726 = vmatpush.msra.mxu0 %v243
  %727 = vmatpush.msra.mxu0 %v242
  %728 = vmatpush.msra.mxu0 %v241
  %729 = vmatpush.msra.mxu0 %v240
  %730 = vmatpush.msra.mxu0 %v239
  %731 = vmatpush.msra.mxu0 %v238
  %732 = vmatpush.msra.mxu0 %v237
  %733 = vmatpush.msra.mxu0 %v236
  %734 = vmatpush.msra.mxu0 %v235
  %735 = vmatmul.f32.gmra.mxu0 %v711
  %v736 = vpop.f32.mrf.mxu0
  %v737 = vadd.f32 1e-05, %v736
  %738 = vdwg.mxu0
  %739 = vmatpush.msra.mxu0 %v266
  %740 = vmatpush.msra.mxu0 %v265
  %741 = vmatpush.msra.mxu0 %v264
  %742 = vmatpush.msra.mxu0 %v263
  %743 = vmatpush.msra.mxu0 %v262
  %744 = vmatpush.msra.mxu0 %v261
  %745 = vmatpush.msra.mxu0 %v260
  %746 = vmatpush.msra.mxu0 %v259
  %747 = vmatpush.msra.mxu0 %v258
  %748 = vmatpush.msra.mxu0 %v257
  %749 = vmatpush.msra.mxu0 %v256
  %750 = vmatpush.msra.mxu0 %v255
  %751 = vmatpush.msra.mxu0 %v254
  %752 = vmatpush.msra.mxu0 %v253
  %753 = vmatpush.msra.mxu0 %v252
  %754 = vmatpush.msra.mxu0 %v251
  %755 = vmatmul.f32.gmra.mxu0 %v712
  %v756 = vpop.f32.mrf.mxu0
  %v757 = vadd.f32 %v737, %v756
  %758 = vdwg.mxu0
  %759 = vmatpush.msra.mxu0 %v282
  %760 = vmatpush.msra.mxu0 %v281
  %761 = vmatpush.msra.mxu0 %v280
  %762 = vmatpush.msra.mxu0 %v279
  %763 = vmatpush.msra.mxu0 %v278
  %764 = vmatpush.msra.mxu0 %v277
  %765 = vmatpush.msra.mxu0 %v276
  %766 = vmatpush.msra.mxu0 %v275
  %767 = vmatpush.msra.mxu0 %v274
  %768 = vmatpush.msra.mxu0 %v273
  %769 = vmatpush.msra.mxu0 %v272
  %770 = vmatpush.msra.mxu0 %v271
  %771 = vmatpush.msra.mxu0 %v270
  %772 = vmatpush.msra.mxu0 %v269
  %773 = vmatpush.msra.mxu0 %v268
  %774 = vmatpush.msra.mxu0 %v267
  %775 = vmatmul.f32.gmra.mxu0 %v713
  %v776 = vpop.f32.mrf.mxu0
  %v777 = vadd.f32 %v757, %v776
  %778 = vdwg.mxu0
  %779 = vmatpush.msra.mxu0 %v298
  %780 = vmatpush.msra.mxu0 %v297
  %781 = vmatpush.msra.mxu0 %v296
  %782 = vmatpush.msra.mxu0 %v295
  %783 = vmatpush.msra.mxu0 %v294
  %784 = vmatpush.msra.mxu0 %v293
  %785 = vmatpush.msra.mxu0 %v292
  %786 = vmatpush.msra.mxu0 %v291
  %787 = vmatpush.msra.mxu0 %v290
  %788 = vmatpush.msra.mxu0 %v289
  %789 = vmatpush.msra.mxu0 %v288
  %790 = vmatpush.msra.mxu0 %v287
  %791 = vmatpush.msra.mxu0 %v286
  %792 = vmatpush.msra.mxu0 %v285
  %793 = vmatpush.msra.mxu0 %v284
  %794 = vmatpush.msra.mxu0 %v283
  %795 = vmatmul.f32.gmra.mxu0 %v714
  %v796 = vpop.f32.mrf.mxu0
  %v797 = vadd.f32 %v777, %v796
  %798 = vdwg.mxu0
  %799 = vmatpush.msra.mxu0 %v314
  %800 = vmatpush.msra.mxu0 %v313
  %801 = vmatpush.msra.mxu0 %v312
  %802 = vmatpush.msra.mxu0 %v311
  %803 = vmatpush.msra.mxu0 %v310
  %804 = vmatpush.msra.mxu0 %v309
  %805 = vmatpush.msra.mxu0 %v308
  %806 = vmatpush.msra.mxu0 %v307
  %807 = vmatpush.msra.mxu0 %v306
  %808 = vmatpush.msra.mxu0 %v305
  %809 = vmatpush.msra.mxu0 %v304
  %810 = vmatpush.msra.mxu0 %v303
  %811 = vmatpush.msra.mxu0 %v302
  %812 = vmatpush.msra.mxu0 %v301
  %813 = vmatpush.msra.mxu0 %v300
  %814 = vmatpush.msra.mxu0 %v299
  %815 = vmatmul.f32.gmra.mxu0 %v715
  %v816 = vpop.f32.mrf.mxu0
  %v817 = vadd.f32 %v797, %v816
  %818 = vdwg.mxu0
  %819 = vmatpush.msra.mxu0 %v330
  %820 = vmatpush.msra.mxu0 %v329
  %821 = vmatpush.msra.mxu0 %v328
  %822 = vmatpush.msra.mxu0 %v327
  %823 = vmatpush.msra.mxu0 %v326
  %824 = vmatpush.msra.mxu0 %v325
  %825 = vmatpush.msra.mxu0 %v324
  %826 = vmatpush.msra.mxu0 %v323
  %827 = vmatpush.msra.mxu0 %v322
  %828 = vmatpush.msra.mxu0 %v321
  %829 = vmatpush.msra.mxu0 %v320
  %830 = vmatpush.msra.mxu0 %v319
  %831 = vmatpush.msra.mxu0 %v318
  %832 = vmatpush.msra.mxu0 %v317
  %833 = vmatpush.msra.mxu0 %v316
  %834 = vmatpush.msra.mxu0 %v315
  %835 = vmatmul.f32.gmra.mxu0 %v716
  %v836 = vpop.f32.mrf.mxu0
  %v837 = vadd.f32 %v817, %v836
  %838 = vdwg.mxu0
  %839 = vmatpush.msra.mxu0 %v346
  %840 = vmatpush.msra.mxu0 %v345
  %841 = vmatpush.msra.mxu0 %v344
  %842 = vmatpush.msra.mxu0 %v343
  %843 = vmatpush.msra.mxu0 %v342
  %844 = vmatpush.msra.mxu0 %v341
  %845 = vmatpush.msra.mxu0 %v340
  %846 = vmatpush.msra.mxu0 %v339
  %847 = vmatpush.msra.mxu0 %v338
  %848 = vmatpush.msra.mxu0 %v337
  %849 = vmatpush.msra.mxu0 %v336
  %850 = vmatpush.msra.mxu0 %v335
  %851 = vmatpush.msra.mxu0 %v334
  %852 = vmatpush.msra.mxu0 %v333
  %853 = vmatpush.msra.mxu0 %v332
  %854 = vmatpush.msra.mxu0 %v331
  %855 = vmatmul.f32.gmra.mxu0 %v717
  %v856 = vpop.f32.mrf.mxu0
  %v857 = vadd.f32 %v837, %v856
  %858 = vdwg.mxu0
  %859 = vmatpush.msra.mxu0 %v362
  %860 = vmatpush.msra.mxu0 %v361
  %861 = vmatpush.msra.mxu0 %v360
  %862 = vmatpush.msra.mxu0 %v359
  %863 = vmatpush.msra.mxu0 %v358
  %864 = vmatpush.msra.mxu0 %v357
  %865 = vmatpush.msra.mxu0 %v356
  %866 = vmatpush.msra.mxu0 %v355
  %867 = vmatpush.msra.mxu0 %v354
  %868 = vmatpush.msra.mxu0 %v353
  %869 = vmatpush.msra.mxu0 %v352
  %870 = vmatpush.msra.mxu0 %v351
  %871 = vmatpush.msra.mxu0 %v350
  %872 = vmatpush.msra.mxu0 %v349
  %873 = vmatpush.msra.mxu0 %v348
  %874 = vmatpush.msra.mxu0 %v347
  %875 = vmatmul.f32.gmra.mxu0 %v718
  %v876 = vpop.f32.mrf.mxu0
  %v877 = vadd.f32 %v857, %v876
  %878 = vdwg.mxu0
  %v879 = vrsqrt.pop %v877
  %v880 = vmul.f32 %v879, %v877
  %v881 = vmul.f32 %v880, %v879
  %v882 = vmul.f32 0.5, %v881
  %v883 = vsub.f32 1.5, %v882
  %v884 = vmul.f32 %v879, %v883
  %vm885 = vweird.f32 %v877
  %vm886 = vweird.f32 %v879
  %vm887 = vmor %vm885, %vm886
  %v888 = vsel %vm887, %v879, %v884
  %v890 = vsel %vm539, %v888, 0
  %892 = vmatpush.msra.mxu0 0.0
  %893 = vmatpush.msra.mxu0 0.0
  %894 = vmatpush.msra.mxu0 0.0
  %895 = vmatpush.msra.mxu0 0.0
  %896 = vmatpush.msra.mxu0 0.0
  %897 = vmatpush.msra.mxu0 0.0
  %898 = vmatpush.msra.mxu0 0.0
  %899 = vmatpush.msra.mxu0 0.0
  %900 = vmatpush.msra.mxu0 0.0
  %901 = vmatpush.msra.mxu0 0.0
  %902 = vmatpush.msra.mxu0 0.0
  %903 = vmatpush.msra.mxu0 0.0
  %904 = vmatpush.msra.mxu0 0.0
  %905 = vmatpush.msra.mxu0 0.0
  %906 = vmatpush.msra.mxu0 %v371
  %907 = vmatpush.msra.mxu0 %v363
  %908 = vmatmul.f32.gmra.mxu0 %v890
  %v909 = vpop.f32.mrf.mxu0
  %v910 = vadd.f32 0.0, %v909
  %911 = vdwg.mxu0
  %912 = vmatpush.msra.mxu0 0.0
  %913 = vmatpush.msra.mxu0 0.0
  %914 = vmatpush.msra.mxu0 0.0
  %915 = vmatpush.msra.mxu0 0.0
  %916 = vmatpush.msra.mxu0 0.0
  %917 = vmatpush.msra.mxu0 0.0
  %918 = vmatpush.msra.mxu0 0.0
  %919 = vmatpush.msra.mxu0 0.0
  %920 = vmatpush.msra.mxu0 0.0
  %921 = vmatpush.msra.mxu0 0.0
  %922 = vmatpush.msra.mxu0 0.0
  %923 = vmatpush.msra.mxu0 0.0
  %924 = vmatpush.msra.mxu0 0.0
  %925 = vmatpush.msra.mxu0 0.0
  %926 = vmatpush.msra.mxu0 %v372
  %927 = vmatpush.msra.mxu0 %v364
  %928 = vmatmul.f32.gmra.mxu0 %v890
  %v929 = vpop.f32.mrf.mxu0
  %v930 = vadd.f32 0.0, %v929
  %931 = vdwg.mxu0
  %932 = vmatpush.msra.mxu0 0.0
  %933 = vmatpush.msra.mxu0 0.0
  %934 = vmatpush.msra.mxu0 0.0
  %935 = vmatpush.msra.mxu0 0.0
  %936 = vmatpush.msra.mxu0 0.0
  %937 = vmatpush.msra.mxu0 0.0
  %938 = vmatpush.msra.mxu0 0.0
  %939 = vmatpush.msra.mxu0 0.0
  %940 = vmatpush.msra.mxu0 0.0
  %941 = vmatpush.msra.mxu0 0.0
  %942 = vmatpush.msra.mxu0 0.0
  %943 = vmatpush.msra.mxu0 0.0
  %944 = vmatpush.msra.mxu0 0.0
  %945 = vmatpush.msra.mxu0 0.0
  %946 = vmatpush.msra.mxu0 %v373
  %947 = vmatpush.msra.mxu0 %v365
  %948 = vmatmul.f32.gmra.mxu0 %v890
  %v949 = vpop.f32.mrf.mxu0
  %v950 = vadd.f32 0.0, %v949
  %951 = vdwg.mxu0
  %952 = vmatpush.msra.mxu0 0.0
  %953 = vmatpush.msra.mxu0 0.0
  %954 = vmatpush.msra.mxu0 0.0
  %955 = vmatpush.msra.mxu0 0.0
  %956 = vmatpush.msra.mxu0 0.0
  %957 = vmatpush.msra.mxu0 0.0
  %958 = vmatpush.msra.mxu0 0.0
  %959 = vmatpush.msra.mxu0 0.0
  %960 = vmatpush.msra.mxu0 0.0
  %961 = vmatpush.msra.mxu0 0.0
  %962 = vmatpush.msra.mxu0 0.0
  %963 = vmatpush.msra.mxu0 0.0
  %964 = vmatpush.msra.mxu0 0.0
  %965 = vmatpush.msra.mxu0 0.0
  %966 = vmatpush.msra.mxu0 %v374
  %967 = vmatpush.msra.mxu0 %v366
  %968 = vmatmul.f32.gmra.mxu0 %v890
  %v969 = vpop.f32.mrf.mxu0
  %v970 = vadd.f32 0.0, %v969
  %971 = vdwg.mxu0
  %972 = vmatpush.msra.mxu0 0.0
  %973 = vmatpush.msra.mxu0 0.0
  %974 = vmatpush.msra.mxu0 0.0
  %975 = vmatpush.msra.mxu0 0.0
  %976 = vmatpush.msra.mxu0 0.0
  %977 = vmatpush.msra.mxu0 0.0
  %978 = vmatpush.msra.mxu0 0.0
  %979 = vmatpush.msra.mxu0 0.0
  %980 = vmatpush.msra.mxu0 0.0
  %981 = vmatpush.msra.mxu0 0.0
  %982 = vmatpush.msra.mxu0 0.0
  %983 = vmatpush.msra.mxu0 0.0
  %984 = vmatpush.msra.mxu0 0.0
  %985 = vmatpush.msra.mxu0 0.0
  %986 = vmatpush.msra.mxu0 %v375
  %987 = vmatpush.msra.mxu0 %v367
  %988 = vmatmul.f32.gmra.mxu0 %v890
  %v989 = vpop.f32.mrf.mxu0
  %v990 = vadd.f32 0.0, %v989
  %991 = vdwg.mxu0
  %992 = vmatpush.msra.mxu0 0.0
  %993 = vmatpush.msra.mxu0 0.0
  %994 = vmatpush.msra.mxu0 0.0
  %995 = vmatpush.msra.mxu0 0.0
  %996 = vmatpush.msra.mxu0 0.0
  %997 = vmatpush.msra.mxu0 0.0
  %998 = vmatpush.msra.mxu0 0.0
  %999 = vmatpush.msra.mxu0 0.0
  %1000 = vmatpush.msra.mxu0 0.0
  %1001 = vmatpush.msra.mxu0 0.0
  %1002 = vmatpush.msra.mxu0 0.0
  %1003 = vmatpush.msra.mxu0 0.0
  %1004 = vmatpush.msra.mxu0 0.0
  %1005 = vmatpush.msra.mxu0 0.0
  %1006 = vmatpush.msra.mxu0 %v376
  %1007 = vmatpush.msra.mxu0 %v368
  %1008 = vmatmul.f32.gmra.mxu0 %v890
  %v1009 = vpop.f32.mrf.mxu0
  %v1010 = vadd.f32 0.0, %v1009
  %1011 = vdwg.mxu0
  %1012 = vmatpush.msra.mxu0 0.0
  %1013 = vmatpush.msra.mxu0 0.0
  %1014 = vmatpush.msra.mxu0 0.0
  %1015 = vmatpush.msra.mxu0 0.0
  %1016 = vmatpush.msra.mxu0 0.0
  %1017 = vmatpush.msra.mxu0 0.0
  %1018 = vmatpush.msra.mxu0 0.0
  %1019 = vmatpush.msra.mxu0 0.0
  %1020 = vmatpush.msra.mxu0 0.0
  %1021 = vmatpush.msra.mxu0 0.0
  %1022 = vmatpush.msra.mxu0 0.0
  %1023 = vmatpush.msra.mxu0 0.0
  %1024 = vmatpush.msra.mxu0 0.0
  %1025 = vmatpush.msra.mxu0 0.0
  %1026 = vmatpush.msra.mxu0 %v377
  %1027 = vmatpush.msra.mxu0 %v369
  %1028 = vmatmul.f32.gmra.mxu0 %v890
  %v1029 = vpop.f32.mrf.mxu0
  %v1030 = vadd.f32 0.0, %v1029
  %1031 = vdwg.mxu0
  %1032 = vmatpush.msra.mxu0 0.0
  %1033 = vmatpush.msra.mxu0 0.0
  %1034 = vmatpush.msra.mxu0 0.0
  %1035 = vmatpush.msra.mxu0 0.0
  %1036 = vmatpush.msra.mxu0 0.0
  %1037 = vmatpush.msra.mxu0 0.0
  %1038 = vmatpush.msra.mxu0 0.0
  %1039 = vmatpush.msra.mxu0 0.0
  %1040 = vmatpush.msra.mxu0 0.0
  %1041 = vmatpush.msra.mxu0 0.0
  %1042 = vmatpush.msra.mxu0 0.0
  %1043 = vmatpush.msra.mxu0 0.0
  %1044 = vmatpush.msra.mxu0 0.0
  %1045 = vmatpush.msra.mxu0 0.0
  %1046 = vmatpush.msra.mxu0 %v378
  %1047 = vmatpush.msra.mxu0 %v370
  %1048 = vmatmul.f32.gmra.mxu0 %v890
  %v1049 = vpop.f32.mrf.mxu0
  %v1050 = vadd.f32 0.0, %v1049
  %1051 = vdwg.mxu0
  %v1052 = vmul.f32 %v703, %v910
  %v1053 = vmul.f32 %v704, %v930
  %v1054 = vmul.f32 %v705, %v950
  %v1055 = vmul.f32 %v706, %v970
  %v1056 = vmul.f32 %v707, %v990
  %v1057 = vmul.f32 %v708, %v1010
  %v1058 = vmul.f32 %v709, %v1030
  %v1059 = vmul.f32 %v710, %v1050
  %vm1060 = vcmp.ge.f32.partialorder %v1052, 0.0
  %vm1061 = vcmp.ge.f32.partialorder %v1053, 0.0
  %vm1062 = vcmp.ge.f32.partialorder %v1054, 0.0
  %vm1063 = vcmp.ge.f32.partialorder %v1055, 0.0
  %vm1064 = vcmp.ge.f32.partialorder %v1056, 0.0
  %vm1065 = vcmp.ge.f32.partialorder %v1057, 0.0
  %vm1066 = vcmp.ge.f32.partialorder %v1058, 0.0
  %vm1067 = vcmp.ge.f32.partialorder %v1059, 0.0
  %v1068 = vmul.f32 %v1052, 0.01
  %v1069 = vmul.f32 %v1053, 0.01
  %v1070 = vmul.f32 %v1054, 0.01
  %v1071 = vmul.f32 %v1055, 0.01
  %v1072 = vmul.f32 %v1056, 0.01
  %v1073 = vmul.f32 %v1057, 0.01
  %v1074 = vmul.f32 %v1058, 0.01
  %v1075 = vmul.f32 %v1059, 0.01
  %v1076 = vsel %vm1060, %v1052, %v1068
  %v1077 = vsel %vm1061, %v1053, %v1069
  %v1078 = vsel %vm1062, %v1054, %v1070
  %v1079 = vsel %vm1063, %v1055, %v1071
  %v1080 = vsel %vm1064, %v1056, %v1072
  %v1081 = vsel %vm1065, %v1057, %v1073
  %v1082 = vsel %vm1066, %v1058, %v1074
  %v1083 = vsel %vm1067, %v1059, %v1075
  %v1092 = vrot.slane %v1077, 6
  %v1093 = vrot.slane %v1078, 4
  %v1094 = vrot.slane %v1079, 2
  %v1095 = vrot.slane %v1081, 6
  %v1096 = vrot.slane %v1082, 4
  %v1097 = vrot.slane %v1083, 2
  %vm1098 = vcmask 1041408
  %v1099 = vsel %vm1098, %v1076, %v1092
  %vm1100 = vcmask 1045508
  %v1101 = vsel %vm1100, %v1093, %v1094
  %vm1102 = vcmask 1043456
  %v1103 = vsel %vm1102, %v1099, %v1101
  %v1104 = vsel %vm1098, %v1080, %v1095
  %v1105 = vsel %vm1100, %v1096, %v1097
  %v1106 = vsel %vm1102, %v1104, %v1105
  %1109 = vst [vmem:[%s5] sm:$0xff] %v1103
  %1110 = vst [vmem:[%s5 + $0x8] sm:$0xff] %v1106
  // Predicated region
  $region22: #{neck_decoder_forward.1} parent=0 // pred_check
    _
  $region23: #{neck_decoder_forward.1} parent=0 // pred_check_branch
    %1112 = sbr.rel (0) target = $region25
  $region24: #{neck_decoder_forward.1} parent=0 // pred_region
    _
  $region25: #{neck_decoder_forward.1} parent=0 // pred_fallthru
    _
  // Predicated region
  $region26: #{neck_decoder_forward.1} parent=0 // pred_check
    _
  $region27: #{neck_decoder_forward.1} parent=0 // pred_check_branch
    %1114 = sbr.rel (0) target = $region29
  $region28: #{neck_decoder_forward.1} parent=0 // pred_region
    _
  $region29: #{neck_decoder_forward.1} parent=0 // pred_fallthru
    _

</llo_original>
